<compile_context>
chip_gen: v5e
topology: v5e:2x2
jax: 0.10.0
libtpu: 0.0.40
codegen_flags: <defaults>
</compile_context>

<pallas_src>
import functools

import jax
import jax.numpy as jnp
import numpy as np
from jax.experimental import pallas as pl
from jax.experimental.pallas import tpu as pltpu

EPS = 1e-5
LANE = 128
VMEM_LIMIT = 32 * 1024 * 1024  # safe on v5e / v6e / v7x


def _round_up(x, m):
    return (x + m - 1) // m * m


def _choose_tm(m, target=512):
    """Rows per M tile: multiple of 16 (bf16 sublane tiling), capped at `target`."""
    if m <= target:
        return _round_up(m, 16)
    return target


# ---------------------------------------------------------------------------
# Pass 1: tiled matmul (bf16 operands, f32 MXU accumulation) + per-channel
# sum / sum-of-squares accumulated across M tiles (BatchNorm batch stats).
# ---------------------------------------------------------------------------
def _matmul_stats_kernel(p_ref, w_ref, y_ref, sum_ref, ssq_ref):
    i = pl.program_id(0)
    y = jnp.dot(p_ref[...], w_ref[...], preferred_element_type=jnp.float32)
    y_ref[...] = y

    @pl.when(i == 0)
    def _():
        sum_ref[...] = jnp.zeros_like(sum_ref)
        ssq_ref[...] = jnp.zeros_like(ssq_ref)

    sum_ref[...] += jnp.sum(y, axis=0, keepdims=True)
    ssq_ref[...] += jnp.sum(y * y, axis=0, keepdims=True)


def _matmul_stats(patches, w_mat, tm):
    mp, k = patches.shape
    cp = w_mat.shape[1]
    return pl.pallas_call(
        _matmul_stats_kernel,
        out_shape=(
            jax.ShapeDtypeStruct((mp, cp), jnp.float32),
            jax.ShapeDtypeStruct((1, cp), jnp.float32),
            jax.ShapeDtypeStruct((1, cp), jnp.float32),
        ),
        grid=(mp // tm,),
        in_specs=[
            pl.BlockSpec((tm, k), lambda i: (i, 0)),
            pl.BlockSpec((k, cp), lambda i: (0, 0)),
        ],
        out_specs=(
            pl.BlockSpec((tm, cp), lambda i: (i, 0)),
            pl.BlockSpec((1, cp), lambda i: (0, 0)),   # stats: revisited block
            pl.BlockSpec((1, cp), lambda i: (0, 0)),
        ),
        compiler_params=pltpu.CompilerParams(
            dimension_semantics=("arbitrary",),       # stats accumulate over M
            vmem_limit_bytes=VMEM_LIMIT),
    )(patches, w_mat)


# ---------------------------------------------------------------------------
# Pass 2: apply BN (precomputed scale/shift) + optional residual + optional ReLU
# ---------------------------------------------------------------------------
def _bn_apply_kernel(y_ref, sc_ref, sh_ref, o_ref, *, relu):
    out = y_ref[...] * sc_ref[...] + sh_ref[...]
    if relu:
        out = jnp.maximum(out, 0.0)
    o_ref[...] = out.astype(o_ref.dtype)


def _bn_apply_res_kernel(y_ref, sc_ref, sh_ref, r_ref, o_ref, *, relu):
    out = y_ref[...] * sc_ref[...] + sh_ref[...] + r_ref[...].astype(jnp.float32)
    if relu:
        out = jnp.maximum(out, 0.0)
    o_ref[...] = out.astype(o_ref.dtype)


def _bn_apply(y, scale, shift, residual, *, relu, out_dtype, tm):
    mp, cp = y.shape
    row_spec = pl.BlockSpec((tm, cp), lambda i: (i, 0))
    vec_spec = pl.BlockSpec((1, cp), lambda i: (0, 0))
    if residual is None:
        kernel = functools.partial(_bn_apply_kernel, relu=relu)
        in_specs = [row_spec, vec_spec, vec_spec]
        args = (y, scale, shift)
    else:
        kernel = functools.partial(_bn_apply_res_kernel, relu=relu)
        in_specs = [row_spec, vec_spec, vec_spec, row_spec]
        args = (y, scale, shift, residual)
    return pl.pallas_call(
        kernel,
        out_shape=jax.ShapeDtypeStruct((mp, cp), out_dtype),
        grid=(mp // tm,),
        in_specs=in_specs,
        out_specs=row_spec,
        compiler_params=pltpu.CompilerParams(
            dimension_semantics=("parallel",),        # independent M tiles
            vmem_limit_bytes=VMEM_LIMIT),
    )(*args)


def conv_bn(patches, w_mat, gamma, beta, residual, *, true_m, relu, out_dtype, tm):
    """conv (as matmul) -> training-mode BN -> [+residual] -> [ReLU]."""
    y, s, q = _matmul_stats(patches, w_mat, tm)
    mean = s / true_m                                   # padded rows contribute 0
    var = jnp.maximum(q / true_m - mean * mean, 0.0)    # biased variance, f32
    scale = gamma * jax.lax.rsqrt(var + EPS)
    shift = beta - mean * scale
    return _bn_apply(y, scale, shift, residual, relu=relu,
                     out_dtype=out_dtype, tm=tm)


# ---------------------------------------------------------------------------
# Plain-JAX glue: im2col patch extraction (symmetric zero padding, like PyTorch).
# TODO(synk): replace explicit im2col with 9 shifted in-kernel matmuls
# (implicit im2col) to remove the ~9x HBM read amplification on the 3x3 convs.
# ---------------------------------------------------------------------------
def im2col(x_nhwc, ksize, stride):
    n, h, w, c = x_nhwc.shape
    pad = (ksize - 1) // 2
    xp = jnp.pad(x_nhwc, ((0, 0), (pad, pad), (pad, pad), (0, 0)))
    ho = (h + 2 * pad - ksize) // stride + 1
    wo = (w + 2 * pad - ksize) // stride + 1
    cols = []
    for kh in range(ksize):
        for kw in range(ksize):
            cols.append(xp[:, kh: kh + (ho - 1) * stride + 1: stride,
                              kw: kw + (wo - 1) * stride + 1: stride, :])
    patches = jnp.concatenate(cols, axis=-1)            # (N, Ho, Wo, k*k*C)
    return patches.reshape(n * ho * wo, ksize * ksize * c), (n, ho, wo)


def _pad_rows(x, mp):
    m = x.shape[0]
    return x if m == mp else jnp.pad(x, ((0, mp - m), (0, 0)))


def _pad_cols(x, cp):
    c = x.shape[-1]
    if c == cp:
        return x
    return jnp.pad(x, ((0, 0),) * (x.ndim - 1) + ((0, cp - c),))


# ---------------------------------------------------------------------------
# ResidualBlock forward (NHWC in / NHWC out)
# ---------------------------------------------------------------------------
def residual_block_forward(x_nhwc, params, stride):
    n, h, w, cin = x_nhwc.shape
    cout = params["w1"].shape[-1]
    cp = _round_up(cout, LANE)                          # lane-dense channels

    # conv1 (3x3, stride) -> bn1 -> relu
    p1, (n1, ho, wo) = im2col(x_nhwc, 3, stride)
    m = n1 * ho * wo
    tm = _choose_tm(m)
    mp = _round_up(m, tm)

    p1 = _pad_rows(p1, mp).astype(jnp.bfloat16)
    w1 = _pad_cols(params["w1"].reshape(-1, cout), cp).astype(jnp.bfloat16)
    g1 = _pad_cols(params["g1"], cp)
    b1 = _pad_cols(params["b1"], cp)
    out1 = conv_bn(p1, w1, g1, b1, None, true_m=m, relu=True,
                   out_dtype=jnp.bfloat16, tm=tm)       # bf16 intermediate

    # downsample branch (1x1 conv, stride) -> bn   (or identity passthrough)
    if stride != 1 or cin != cout:
        pd, _ = im2col(x_nhwc, 1, stride)
        pd = _pad_rows(pd, mp).astype(jnp.bfloat16)
        wd = _pad_cols(params["wd"].reshape(-1, cout), cp).astype(jnp.bfloat16)
        gd = _pad_cols(params["gd"], cp)
        bd = _pad_cols(params["bd"], cp)
        identity = conv_bn(pd, wd, gd, bd, None, true_m=m, relu=False,
                           out_dtype=jnp.float32, tm=tm)
    else:
        identity = _pad_rows(_pad_cols(x_nhwc.reshape(n * h * w, cin), cp), mp)

    # conv2 (3x3, stride 1) -> bn2 -> (+identity) -> relu
    out1_img = out1[:m, :cout].reshape(n1, ho, wo, cout)
    p2, _ = im2col(out1_img, 3, 1)                      # bf16 patches
    p2 = _pad_rows(p2, mp)
    w2 = _pad_cols(params["w2"].reshape(-1, cout), cp).astype(jnp.bfloat16)
    g2 = _pad_cols(params["g2"], cp)
    b2 = _pad_cols(params["b2"], cp)
    out = conv_bn(p2, w2, g2, b2, identity, true_m=m, relu=True,
                  out_dtype=jnp.float32, tm=tm)
    return out[:m, :cout].reshape(n1, ho, wo, cout)


# ---------------------------------------------------------------------------
# Pure-JAX reference (PyTorch semantics: symmetric padding, training-mode BN)
# ---------------------------------------------------------------------------
def _ref_bn(y, g, b):
    mean = jnp.mean(y, axis=(0, 1, 2), keepdims=True)
    var = jnp.mean(jnp.square(y - mean), axis=(0, 1, 2), keepdims=True)
    return (y - mean) * jax.lax.rsqrt(var + EPS) * g.reshape(1, 1, 1, -1) \
        + b.reshape(1, 1, 1, -1)


def reference_forward(x_nhwc, params, stride):
    dn = ("NHWC", "HWIO", "NHWC")
    hp = jax.lax.Precision.HIGHEST
    conv = lambda x, w, s, pad: jax.lax.conv_general_dilated(
        x, w, (s, s), pad, dimension_numbers=dn, precision=hp)
    out = conv(x_nhwc, params["w1"], stride, [(1, 1), (1, 1)])
    out = jnp.maximum(_ref_bn(out, params["g1"], params["b1"]), 0.0)
    out = conv(out, params["w2"], 1, [(1, 1), (1, 1)])
    out = _ref_bn(out, params["g2"], params["b2"])
    cin, cout = x_nhwc.shape[-1], params["w1"].shape[-1]
    if stride != 1 or cin != cout:
        idt = conv(x_nhwc, params["wd"], stride, [(0, 0), (0, 0)])
        idt = _ref_bn(idt, params["gd"], params["bd"])
    else:
        idt = x_nhwc
    return jnp.maximum(out + idt, 0.0)


# ---------------------------------------------------------------------------
if __name__ == "__main__":
    # ResidualBlock(in_channels=4, out_channels=8, stride=2) — exercises the
    # 1x1-conv downsample branch.
    N, Cin, H, W = 2, 4, 16, 16
    Cout, stride = 8, 2

    key = jax.random.PRNGKey(0)
    k1, k2, k3, kx = jax.random.split(key, 4)

    params = {
        # conv weights in HWIO (== PyTorch OIHW transposed (2,3,1,0))
        "w1": jax.random.normal(k1, (3, 3, Cin, Cout), jnp.float32) * 0.1,
        "w2": jax.random.normal(k2, (3, 3, Cout, Cout), jnp.float32) * 0.1,
        "wd": jax.random.normal(k3, (1, 1, Cin, Cout), jnp.float32) * 0.1,
        # BatchNorm affine params: PyTorch default init (weight=1, bias=0)
        "g1": jnp.ones((1, Cout), jnp.float32),
        "b1": jnp.zeros((1, Cout), jnp.float32),
        "g2": jnp.ones((1, Cout), jnp.float32),
        "b2": jnp.zeros((1, Cout), jnp.float32),
        "gd": jnp.ones((1, Cout), jnp.float32),
        "bd": jnp.zeros((1, Cout), jnp.float32),
    }
    # TODO(synk): BatchNorm running-stats update is a training side effect that
    # does not influence the forward output; it is not modelled here.

    x_nchw = jax.random.normal(kx, (N, Cin, H, W), jnp.float32)
    x_nhwc = jnp.transpose(x_nchw, (0, 2, 3, 1))

    out = jax.block_until_ready(residual_block_forward(x_nhwc, params, stride))
    ref = jax.block_until_ready(reference_forward(x_nhwc, params, stride))

    # Pallas path uses bf16 MXU operands / bf16 intermediate vs f32 HIGHEST
    # reference -> tolerance loosened accordingly.
    if not np.allclose(np.asarray(out), np.asarray(ref), atol=5e-2, rtol=5e-2):
        diff = np.max(np.abs(np.asarray(out) - np.asarray(ref)))
        raise AssertionError(f"Pallas output does not match JAX reference (max diff {diff})")

    print("KERNEL_OK")
</pallas_src>

<mosaic_0001>
module attributes {stable_mosaic.version = 11 : i64} {
  func.func @_matmul_stats_kernel(%arg0: i32, %arg1: memref<128x36xbf16, #tpu.memory_space<vmem>>, %arg2: memref<36x128xbf16, #tpu.memory_space<vmem>>, %arg3: memref<128x128xf32, #tpu.memory_space<vmem>>, %arg4: memref<1x128xf32, #tpu.memory_space<vmem>>, %arg5: memref<1x128xf32, #tpu.memory_space<vmem>>) attributes {dimension_semantics = [#tpu.dimension_semantics<arbitrary>], iteration_bounds = array<i64: 1>, scalar_prefetch = 0 : i64, scratch_operands = 0 : i64, tpu.core_type = #tpu.core_type<tc>, window_params = [{transform_indices = @transform_0, window_bounds = array<i64: 128, 36>}, {pipeline_mode = #tpu.pipeline_mode<synchronous>, transform_indices = @transform_1, window_bounds = array<i64: 36, 128>}, {transform_indices = @transform_2, window_bounds = array<i64: 128, 128>}, {pipeline_mode = #tpu.pipeline_mode<synchronous>, transform_indices = @transform_3, window_bounds = array<i64: 1, 128>}, {pipeline_mode = #tpu.pipeline_mode<synchronous>, transform_indices = @transform_4, window_bounds = array<i64: 1, 128>}]} {
    %c0 = arith.constant 0 : index
    %c0_0 = arith.constant 0 : index
    %0 = vector.load %arg1[%c0, %c0_0] : memref<128x36xbf16, #tpu.memory_space<vmem>>, vector<128x36xbf16>
    %c0_1 = arith.constant 0 : index
    %c0_2 = arith.constant 0 : index
    %1 = vector.load %arg2[%c0_1, %c0_2] : memref<36x128xbf16, #tpu.memory_space<vmem>>, vector<36x128xbf16>
    %cst = arith.constant dense<0.000000e+00> : vector<128x128xf32>
    %2 = tpu.matmul %0, %1, %cst {dimension_numbers = #tpu.dot_dimension_numbers<[1], [0], [0], [1], [0, 0, 1, 1], [], []>} : vector<128x36xbf16>, vector<36x128xbf16>, vector<128x128xf32> -> vector<128x128xf32>
    %c0_3 = arith.constant 0 : index
    %c0_4 = arith.constant 0 : index
    %3 = vector.load %arg3[%c0_3, %c0_4] : memref<128x128xf32, #tpu.memory_space<vmem>>, vector<128x128xf32>
    tpu.vector_store %arg3[%c0_3, %c0_4], %2 {strides = array<i32>} : memref<128x128xf32, #tpu.memory_space<vmem>>, vector<128x128xf32>,
    %c0_i32 = arith.constant 0 : i32
    %4 = arith.cmpi eq, %arg0, %c0_i32 : i32
    %5 = arith.extui %4 : i1 to i32
    %c0_i32_5 = arith.constant 0 : i32
    %6 = arith.cmpi ne, %5, %c0_i32_5 : i32
    scf.if %6 {
      %cst_16 = arith.constant 0.000000e+00 : f32
      %18 = vector.broadcast %cst_16 : f32 to vector<1x128xf32>
      %c0_17 = arith.constant 0 : index
      %c0_18 = arith.constant 0 : index
      %19 = vector.load %arg4[%c0_17, %c0_18] : memref<1x128xf32, #tpu.memory_space<vmem>>, vector<1x128xf32>
      tpu.vector_store %arg4[%c0_17, %c0_18], %18 {strides = array<i32>} : memref<1x128xf32, #tpu.memory_space<vmem>>, vector<1x128xf32>,
      %cst_19 = arith.constant 0.000000e+00 : f32
      %20 = vector.broadcast %cst_19 : f32 to vector<1x128xf32>
      %c0_20 = arith.constant 0 : index
      %c0_21 = arith.constant 0 : index
      %21 = vector.load %arg5[%c0_20, %c0_21] : memref<1x128xf32, #tpu.memory_space<vmem>>, vector<1x128xf32>
      tpu.vector_store %arg5[%c0_20, %c0_21], %20 {strides = array<i32>} : memref<1x128xf32, #tpu.memory_space<vmem>>, vector<1x128xf32>,
    } else {
    }
    %c0_6 = arith.constant 0 : index
    %c0_7 = arith.constant 0 : index
    %7 = vector.load %arg4[%c0_6, %c0_7] : memref<1x128xf32, #tpu.memory_space<vmem>>, vector<1x128xf32>
    %cst_8 = arith.constant dense<0.000000e+00> : vector<128xf32>
    %8 = vector.multi_reduction <add>, %2, %cst_8 [0] : vector<128x128xf32> to vector<128xf32>
    %9 = vector.shape_cast %8 : vector<128xf32> to vector<1x128xf32>
    %10 = arith.addf %7, %9 : vector<1x128xf32>
    %c0_9 = arith.constant 0 : index
    %c0_10 = arith.constant 0 : index
    %11 = vector.load %arg4[%c0_9, %c0_10] : memref<1x128xf32, #tpu.memory_space<vmem>>, vector<1x128xf32>
    tpu.vector_store %arg4[%c0_9, %c0_10], %10 {strides = array<i32>} : memref<1x128xf32, #tpu.memory_space<vmem>>, vector<1x128xf32>,
    %c0_11 = arith.constant 0 : index
    %c0_12 = arith.constant 0 : index
    %12 = vector.load %arg5[%c0_11, %c0_12] : memref<1x128xf32, #tpu.memory_space<vmem>>, vector<1x128xf32>
    %13 = arith.mulf %2, %2 : vector<128x128xf32>
    %cst_13 = arith.constant dense<0.000000e+00> : vector<128xf32>
    %14 = vector.multi_reduction <add>, %13, %cst_13 [0] : vector<128x128xf32> to vector<128xf32>
    %15 = vector.shape_cast %14 : vector<128xf32> to vector<1x128xf32>
    %16 = arith.addf %12, %15 : vector<1x128xf32>
    %c0_14 = arith.constant 0 : index
    %c0_15 = arith.constant 0 : index
    %17 = vector.load %arg5[%c0_14, %c0_15] : memref<1x128xf32, #tpu.memory_space<vmem>>, vector<1x128xf32>
    tpu.vector_store %arg5[%c0_14, %c0_15], %16 {strides = array<i32>} : memref<1x128xf32, #tpu.memory_space<vmem>>, vector<1x128xf32>,
    return
  }
  func.func @transform_0(%arg0: i32) -> (i32, i32) {
    %c0_i32 = arith.constant 0 : i32
    %c0_i32_0 = arith.constant 0 : i32
    return %arg0, %c0_i32 : i32, i32
  }
  func.func @transform_1(%arg0: i32) -> (i32, i32) {
    %c0_i32 = arith.constant 0 : i32
    %c0_i32_0 = arith.constant 0 : i32
    %c0_i32_1 = arith.constant 0 : i32
    return %c0_i32, %c0_i32_0 : i32, i32
  }
  func.func @transform_2(%arg0: i32) -> (i32, i32) {
    %c0_i32 = arith.constant 0 : i32
    %c0_i32_0 = arith.constant 0 : i32
    return %arg0, %c0_i32 : i32, i32
  }
  func.func @transform_3(%arg0: i32) -> (i32, i32) {
    %c0_i32 = arith.constant 0 : i32
    %c0_i32_0 = arith.constant 0 : i32
    %c0_i32_1 = arith.constant 0 : i32
    return %c0_i32, %c0_i32_0 : i32, i32
  }
  func.func @transform_4(%arg0: i32) -> (i32, i32) {
    %c0_i32 = arith.constant 0 : i32
    %c0_i32_0 = arith.constant 0 : i32
    %c0_i32_1 = arith.constant 0 : i32
    return %c0_i32, %c0_i32_0 : i32, i32
  }
}

</mosaic_0001>

<llo_original>
// kernel: tpu_custom_call.1
$region0: #{tpu_custom_call.1}
  #allocation0 [shape = 'u32[]', space=smem, size = 0x4, offset = 0x4, fixed_abs, tag = 'smem constant byte address 0x4 - core index']
  #allocation1 [shape = 'u32[72,128]{1,0:T(1,128)}', space=vmem, size = 0x9000, scoped, tag = 'internal scratch']
  %s0 = inlined_call_operand.vmem [shape: bf16[128,36], index: 0, kind: input, shape index: {}]
  %s1 = inlined_call_operand.vmem [shape: bf16[36,128], index: 1, kind: input, shape index: {}]
  %s2 = inlined_call_operand.hbm [shape: f32[128,128], index: 2, kind: output, shape index: {0}]
  %s3 = inlined_call_operand.hbm [shape: f32[1,128], index: 3, kind: output, shape index: {1}]
  %s4 = inlined_call_operand.hbm [shape: f32[1,128], index: 4, kind: output, shape index: {2}]
  %5 = xla_tuple %s2, %s3, %s4
  %s6 = sld [smem:[#allocation0]]
  $region38: #{tpu_custom_call.1} parent=0
    _
  %s8 = ssub.s32 1, %s6
  %s9 = scalar_select 0, %s8, %s6
  $region1: #{tpu_custom_call.1} parent=0
    #allocation2 [shape = 'u8[65536]{0}', space=vmem, size = 0x10000, scoped, tag = 'output window, operand 0, single buffered']
    #allocation3 [shape = 's32[1]{0}', space=sflag, size = 0x4, scoped, tag = 'scoped memory for tpu_custom_call.1']
    #allocation4 [shape = 'u8[512]{0}', space=vmem, size = 0x400, scoped, tag = 'output window, operand 1, single buffered']
    #allocation5 [shape = 's32[1]{0}', space=sflag, size = 0x4, scoped, tag = 'scoped memory for tpu_custom_call.1']
    #allocation6 [shape = 'u8[512]{0}', space=vmem, size = 0x400, scoped, tag = 'output window, operand 2, single buffered']
    %10 = vsyncpa [#allocation3], 0
    %11 = vsyncpa [#allocation5], 0
    // Predicated region
    $region2: #{tpu_custom_call.1} parent=1 // pred_check
      _
    $region3: #{tpu_custom_call.1} parent=1 // pred_check_branch
      %13 = sbr.rel (0) target = $region5
    $region4: #{tpu_custom_call.1} parent=1 // pred_region
      _
    $region5: #{tpu_custom_call.1} parent=1 // pred_fallthru
      _
    // Predicated region
    $region6: #{tpu_custom_call.1} parent=1 // pred_check
      _
    $region7: #{tpu_custom_call.1} parent=1 // pred_check_branch
      %15 = sbr.rel (0) target = $region9
    $region8: #{tpu_custom_call.1} parent=1 // pred_region
      _
    $region9: #{tpu_custom_call.1} parent=1 // pred_fallthru
      _
    %v17 = vld [vmem:[%s0] sm:$0xf]
    %v18 = vld [vmem:[%s0 + $0x4] sm:$0xf]
    %v19 = vld [vmem:[%s0 + $0x8] sm:$0xf]
    %v20 = vld [vmem:[%s0 + $0xc] sm:$0xf]
    %v21 = vld [vmem:[%s0 + $0x10] sm:$0xf]
    %v22 = vld [vmem:[%s0 + $0x14] sm:$0xf]
    %v23 = vld [vmem:[%s0 + $0x18] sm:$0xf]
    %v24 = vld [vmem:[%s0 + $0x1c] sm:$0xf]
    %v25 = vld [vmem:[%s0 + $0x20] sm:$0xf]
    %v26 = vld [vmem:[%s0 + $0x24] sm:$0xf]
    %v27 = vld [vmem:[%s0 + $0x28] sm:$0xf]
    %v28 = vld [vmem:[%s0 + $0x2c] sm:$0xf]
    %v29 = vld [vmem:[%s0 + $0x30] sm:$0xf]
    %v30 = vld [vmem:[%s0 + $0x34] sm:$0xf]
    %v31 = vld [vmem:[%s0 + $0x38] sm:$0xf]
    %v32 = vld [vmem:[%s0 + $0x3c] sm:$0xf]
    %v33 = vld [vmem:[%s1] sm:$0xf]
    %v34 = vld [vmem:[%s1 + $0x4] sm:$0xf]
    %v35 = vld [vmem:[%s1 + $0x8] sm:$0xf]
    %v36 = vld [vmem:[%s1 + $0xc] sm:$0xf]
    %v37 = vld [vmem:[%s1 + $0x10] sm:$0x3]
    %v54 = vunpack.c.l.b16 %v17
    %v55 = vunpack.c.l.b16 %v18
    %v56 = vunpack.c.l.b16 %v19
    %v57 = vunpack.c.l.b16 %v20
    %v58 = vunpack.c.l.b16 %v21
    %v59 = vunpack.c.l.b16 %v22
    %v60 = vunpack.c.l.b16 %v23
    %v61 = vunpack.c.l.b16 %v24
    %v62 = vunpack.c.l.b16 %v25
    %v63 = vunpack.c.l.b16 %v26
    %v64 = vunpack.c.l.b16 %v27
    %v65 = vunpack.c.l.b16 %v28
    %v66 = vunpack.c.l.b16 %v29
    %v67 = vunpack.c.l.b16 %v30
    %v68 = vunpack.c.l.b16 %v31
    %v69 = vunpack.c.l.b16 %v32
    %v70 = vpack.c.b16 %v55, %v54
    %v71 = vpack.c.b16 %v57, %v56
    %v72 = vpack.c.b16 %v59, %v58
    %v73 = vpack.c.b16 %v61, %v60
    %v74 = vpack.c.b16 %v63, %v62
    %v75 = vpack.c.b16 %v65, %v64
    %v76 = vpack.c.b16 %v67, %v66
    %v77 = vpack.c.b16 %v69, %v68
    %v83 = vunpack.c.l.b16 %v33
    %v84 = vunpack.c.l.b16 %v34
    %v85 = vunpack.c.l.b16 %v35
    %v86 = vunpack.c.l.b16 %v36
    %v87 = vunpack.c.l.b16 %v37
    %v88 = vpack.c.b16 %v84, %v83
    %v89 = vpack.c.b16 %v86, %v85
    %v90 = vpack.c.b16 %v87, %v87
    %vm93 = vcmask 293888
    %v95 = vsel %vm93, %v70, 0
    %v98 = vsel %vm93, %v71, 0
    %v101 = vsel %vm93, %v72, 0
    %v104 = vsel %vm93, %v73, 0
    %v107 = vsel %vm93, %v74, 0
    %v110 = vsel %vm93, %v75, 0
    %v113 = vsel %vm93, %v76, 0
    %v116 = vsel %vm93, %v77, 0
    %vm118 = vcmask 1041408
    %v120 = vsel %vm118, %v90, 0
    %122 = vmatpush.bf16.msra.mxu0 0
    %123 = vmatpush.bf16.msra.mxu0 0
    %124 = vmatpush.bf16.msra.mxu0 0
    %125 = vmatpush.bf16.msra.mxu0 0
    %126 = vmatpush.bf16.msra.mxu0 0
    %127 = vmatpush.bf16.msra.mxu0 %v120
    %128 = vmatpush.bf16.msra.mxu0 %v89
    %129 = vmatpush.bf16.msra.mxu0 %v88
    %130 = vmatmul.bf16.gmra.mxu0 %v95
    %v131 = vpop.f32.mrf.mxu0
    %v132 = vadd.f32 0.0, %v131
    %v133 = vpop.f32.mrf.mxu0
    %v134 = vadd.f32 0.0, %v133
    %135 = vmatmul.bf16.gmra.mxu0 %v98
    %v136 = vpop.f32.mrf.mxu0
    %v137 = vadd.f32 0.0, %v136
    %v138 = vpop.f32.mrf.mxu0
    %v139 = vadd.f32 0.0, %v138
    %140 = vmatmul.bf16.gmra.mxu0 %v101
    %v141 = vpop.f32.mrf.mxu0
    %v142 = vadd.f32 0.0, %v141
    %v143 = vpop.f32.mrf.mxu0
    %v144 = vadd.f32 0.0, %v143
    %145 = vmatmul.bf16.gmra.mxu0 %v104
    %v146 = vpop.f32.mrf.mxu0
    %v147 = vadd.f32 0.0, %v146
    %v148 = vpop.f32.mrf.mxu0
    %v149 = vadd.f32 0.0, %v148
    %150 = vmatmul.bf16.gmra.mxu0 %v107
    %v151 = vpop.f32.mrf.mxu0
    %v152 = vadd.f32 0.0, %v151
    %v153 = vpop.f32.mrf.mxu0
    %v154 = vadd.f32 0.0, %v153
    %155 = vmatmul.bf16.gmra.mxu0 %v110
    %v156 = vpop.f32.mrf.mxu0
    %v157 = vadd.f32 0.0, %v156
    %v158 = vpop.f32.mrf.mxu0
    %v159 = vadd.f32 0.0, %v158
    %160 = vmatmul.bf16.gmra.mxu0 %v113
    %v161 = vpop.f32.mrf.mxu0
    %v162 = vadd.f32 0.0, %v161
    %v163 = vpop.f32.mrf.mxu0
    %v164 = vadd.f32 0.0, %v163
    %165 = vmatmul.bf16.gmra.mxu0 %v116
    %v166 = vpop.f32.mrf.mxu0
    %v167 = vadd.f32 0.0, %v166
    %v168 = vpop.f32.mrf.mxu0
    %v169 = vadd.f32 0.0, %v168
    %170 = vdwg.mxu0
    %171 = vst [vmem:[#allocation2] sm:$0xff] %v132
    %172 = vst [vmem:[#allocation2 + $0x8] sm:$0xff] %v134
    %173 = vst [vmem:[#allocation2 + $0x10] sm:$0xff] %v137
    %174 = vst [vmem:[#allocation2 + $0x18] sm:$0xff] %v139
    %175 = vst [vmem:[#allocation2 + $0x20] sm:$0xff] %v142
    %176 = vst [vmem:[#allocation2 + $0x28] sm:$0xff] %v144
    %177 = vst [vmem:[#allocation2 + $0x30] sm:$0xff] %v147
    %178 = vst [vmem:[#allocation2 + $0x38] sm:$0xff] %v149
    %179 = vst [vmem:[#allocation2 + $0x40] sm:$0xff] %v152
    %180 = vst [vmem:[#allocation2 + $0x48] sm:$0xff] %v154
    %181 = vst [vmem:[#allocation2 + $0x50] sm:$0xff] %v157
    %182 = vst [vmem:[#allocation2 + $0x58] sm:$0xff] %v159
    %183 = vst [vmem:[#allocation2 + $0x60] sm:$0xff] %v162
    %184 = vst [vmem:[#allocation2 + $0x68] sm:$0xff] %v164
    %185 = vst [vmem:[#allocation2 + $0x70] sm:$0xff] %v167
    %186 = vst [vmem:[#allocation2 + $0x78] sm:$0xff] %v169
    %p187 = scmp.eq.s32.totalorder 0, 0
    // Predicated region
    $region10: #{tpu_custom_call.1} parent=1 // pred_check
      %p188 = pneg %p187
    $region11: #{tpu_custom_call.1} parent=1 // pred_check_branch
      %190 = sbr.rel (%p188) target = $region13
    $region12: #{tpu_custom_call.1} parent=1 // pred_region
      %191 = vst [vmem:[#allocation4] sm:$0x1] 0.0
      %192 = vst [vmem:[#allocation6] sm:$0x1] 0.0
    $region13: #{tpu_custom_call.1} parent=1 // pred_fallthru
      _
    %v193 = vld [vmem:[#allocation4] sm:$0x1]
    %v194 = vadd.f32 %v132, %v134
    %v195 = vadd.f32 %v194, %v137
    %v196 = vadd.f32 %v195, %v139
    %v197 = vadd.f32 %v196, %v142
    %v198 = vadd.f32 %v197, %v144
    %v199 = vadd.f32 %v198, %v147
    %v200 = vadd.f32 %v199, %v149
    %v201 = vadd.f32 %v200, %v152
    %v202 = vadd.f32 %v201, %v154
    %v203 = vadd.f32 %v202, %v157
    %v204 = vadd.f32 %v203, %v159
    %v205 = vadd.f32 %v204, %v162
    %v206 = vadd.f32 %v205, %v164
    %v207 = vadd.f32 %v206, %v167
    %v208 = vadd.f32 %v207, %v169
    %v209 = vrot.slane %v208, 4
    %v210 = vadd.f32 %v208, %v209
    %v211 = vrot.slane %v210, 2
    %v212 = vadd.f32 %v210, %v211
    %v213 = vrot.slane %v212, 1
    %v214 = vadd.f32 %v212, %v213
    %v215 = vadd.f32 %v193, %v214
    %216 = vst [vmem:[#allocation4] sm:$0x1] %v215
    %v217 = vld [vmem:[#allocation6] sm:$0x1]
    %v218 = vmul.f32 %v132, %v132
    %v219 = vmul.f32 %v134, %v134
    %v220 = vmul.f32 %v137, %v137
    %v221 = vmul.f32 %v139, %v139
    %v222 = vmul.f32 %v142, %v142
    %v223 = vmul.f32 %v144, %v144
    %v224 = vmul.f32 %v147, %v147
    %v225 = vmul.f32 %v149, %v149
    %v226 = vmul.f32 %v152, %v152
    %v227 = vmul.f32 %v154, %v154
    %v228 = vmul.f32 %v157, %v157
    %v229 = vmul.f32 %v159, %v159
    %v230 = vmul.f32 %v162, %v162
    %v231 = vmul.f32 %v164, %v164
    %v232 = vmul.f32 %v167, %v167
    %v233 = vmul.f32 %v169, %v169
    %v234 = vadd.f32 %v218, %v219
    %v235 = vadd.f32 %v234, %v220
    %v236 = vadd.f32 %v235, %v221
    %v237 = vadd.f32 %v236, %v222
    %v238 = vadd.f32 %v237, %v223
    %v239 = vadd.f32 %v238, %v224
    %v240 = vadd.f32 %v239, %v225
    %v241 = vadd.f32 %v240, %v226
    %v242 = vadd.f32 %v241, %v227
    %v243 = vadd.f32 %v242, %v228
    %v244 = vadd.f32 %v243, %v229
    %v245 = vadd.f32 %v244, %v230
    %v246 = vadd.f32 %v245, %v231
    %v247 = vadd.f32 %v246, %v232
    %v248 = vadd.f32 %v247, %v233
    %v249 = vrot.slane %v248, 4
    %v250 = vadd.f32 %v248, %v249
    %v251 = vrot.slane %v250, 2
    %v252 = vadd.f32 %v250, %v251
    %v253 = vrot.slane %v252, 1
    %v254 = vadd.f32 %v252, %v253
    %v255 = vadd.f32 %v217, %v254
    %256 = vst [vmem:[#allocation6] sm:$0x1] %v255
    // Predicated region
    $region14: #{tpu_custom_call.1} parent=1 // pred_check
      _
    $region15: #{tpu_custom_call.1} parent=1 // pred_check_branch
      %258 = sbr.rel (0) target = $region17
    $region16: #{tpu_custom_call.1} parent=1 // pred_region
      %260 = vsyncadd [#allocation3], 0
      %s261 = sshll.u32 [#allocation2], 4
      %s262 = int_to_ptr.vmem [resolvable:$true] %s261
      %s263 = sshll.u32 %s2, 4
      %s264 = int_to_ptr.hbm [resolvable:$true] %s263
      %269 = dma.vmem_to_hbm [thread:$0]  %s262, 2048, %s264, [#allocation3], 128, 128, 8
    $region17: #{tpu_custom_call.1} parent=1 // pred_fallthru
      _
    // Predicated region
    $region18: #{tpu_custom_call.1} parent=1 // pred_check
      _
    $region19: #{tpu_custom_call.1} parent=1 // pred_check_branch
      %271 = sbr.rel (0) target = $region21
    $region20: #{tpu_custom_call.1} parent=1 // pred_region
      %273 = vsyncadd [#allocation5], 0
      %s275 = sshll.u32 [#allocation4], 4
      %s276 = int_to_ptr.vmem [resolvable:$true] %s275
      %s277 = sshll.u32 %s3, 4
      %s278 = int_to_ptr.hbm [resolvable:$true] %s277
      %280 = dma.vmem_to_hbm [thread:$0]  %s276, 16, %s278, [#allocation5]
    $region21: #{tpu_custom_call.1} parent=1 // pred_fallthru
      _
    // Predicated region
    $region22: #{tpu_custom_call.1} parent=1 // pred_check
      _
    $region23: #{tpu_custom_call.1} parent=1 // pred_check_branch
      %282 = sbr.rel (0) target = $region25
    $region24: #{tpu_custom_call.1} parent=1 // pred_region
      %284 = vsyncadd [#allocation5], 0
      %s286 = sshll.u32 [#allocation6], 4
      %s287 = int_to_ptr.vmem [resolvable:$true] %s286
      %s288 = sshll.u32 %s4, 4
      %s289 = int_to_ptr.hbm [resolvable:$true] %s288
      %291 = dma.vmem_to_hbm [thread:$0]  %s287, 16, %s289, [#allocation5]
    $region25: #{tpu_custom_call.1} parent=1 // pred_fallthru
      _
    // Predicated region
    $region26: #{tpu_custom_call.1} parent=1 // pred_check
      _
    $region27: #{tpu_custom_call.1} parent=1 // pred_check_branch
      %293 = sbr.rel (0) target = $region29
    $region28: #{tpu_custom_call.1} parent=1 // pred_region
      %295 = dma.done [#allocation3], 2048
    $region29: #{tpu_custom_call.1} parent=1 // pred_fallthru
      _
    // Predicated region
    $region30: #{tpu_custom_call.1} parent=1 // pred_check
      _
    $region31: #{tpu_custom_call.1} parent=1 // pred_check_branch
      %297 = sbr.rel (0) target = $region33
    $region32: #{tpu_custom_call.1} parent=1 // pred_region
      %299 = dma.done [#allocation5], 16
    $region33: #{tpu_custom_call.1} parent=1 // pred_fallthru
      _
    // Predicated region
    $region34: #{tpu_custom_call.1} parent=1 // pred_check
      _
    $region35: #{tpu_custom_call.1} parent=1 // pred_check_branch
      %301 = sbr.rel (0) target = $region37
    $region36: #{tpu_custom_call.1} parent=1 // pred_region
      %303 = dma.done [#allocation5], 16
    $region37: #{tpu_custom_call.1} parent=1 // pred_fallthru
      _
    %304 = vsyncpa [#allocation3], 1
    %305 = vsyncpa [#allocation5], 1

</llo_original>
